<compile_context>
chip_gen: v6e
topology: v6e:2x2x1
jax: 0.10.0
libtpu: 0.0.40
codegen_flags: <defaults>
</compile_context>

<pallas_src>
import functools

import jax
import jax.numpy as jnp
import numpy as np
from jax.experimental import pallas as pl
from jax.experimental.pallas import tpu as pltpu

NC = 256  # hidden / output width of the NCE MLP head (self.nc in the module)


def _round_up(x, m):
    return ((x + m - 1) // m) * m


def _mlp_kernel(x_ref, w1_ref, b1_ref, w2_ref, b2_ref, o_ref):
    # x_ref : (TM, K)    one tile of sampled-patch rows
    # w1_ref: (K, NC)    b1_ref: (1, NC)
    # w2_ref: (NC, NC)   b2_ref: (1, NC)
    # o_ref : (TM, NC)
    h = jnp.dot(x_ref[...], w1_ref[...], preferred_element_type=jnp.float32)
    h = jnp.maximum(h + b1_ref[...], 0.0)                      # ReLU
    y = jnp.dot(h, w2_ref[...], preferred_element_type=jnp.float32) + b2_ref[...]
    o_ref[...] = y.astype(o_ref.dtype)


def mlp_head(x, w1, b1, w2, b2, *, tile_m=256):
    """Fused Linear(K,NC) -> ReLU -> Linear(NC,NC) for x of shape (M, K)."""
    M, K = x.shape
    nc = w2.shape[1]

    # Row tile: big enough to amortize per-step overhead, lane-dense output.
    tm = tile_m if M >= tile_m else max(8, _round_up(M, 8))
    Mp = _round_up(M, tm)
    if Mp != M:
        x = jnp.pad(x, ((0, Mp - M), (0, 0)))

    grid = (Mp // tm,)

    out = pl.pallas_call(
        _mlp_kernel,
        out_shape=jax.ShapeDtypeStruct((Mp, nc), x.dtype),
        grid_spec=pltpu.PrefetchScalarGridSpec(
            num_scalar_prefetch=0,
            grid=grid,
            in_specs=[
                # sampled-patch rows: one (tm, K) tile per grid step
                pl.BlockSpec((tm, K), lambda i: (i, 0)),
                # weights / biases: resident across the whole grid
                pl.BlockSpec((K, nc), lambda i: (0, 0)),
                pl.BlockSpec((1, nc), lambda i: (0, 0)),
                pl.BlockSpec((nc, nc), lambda i: (0, 0)),
                pl.BlockSpec((1, nc), lambda i: (0, 0)),
            ],
            out_specs=pl.BlockSpec((tm, nc), lambda i: (i, 0)),
        ),
        compiler_params=pltpu.CompilerParams(
            dimension_semantics=("parallel",)),
    )(x, w1, b1, w2, b2)

    return out[:M]


def _sample_patches(feature, key, num_patches):
    """(B, C, H, W) -> (B*P, C) sample of P random spatial positions."""
    B, C, H, W = feature.shape
    reshape = jnp.transpose(feature, (0, 2, 3, 1)).reshape(B, H * W, C)
    n_take = int(min(num_patches, H * W))
    patch_id = jax.random.permutation(key, H * W)[:n_take]
    sample = jnp.take(reshape, patch_id, axis=1).reshape(-1, C)
    return sample, patch_id


def nce_mlp_forward(features, params, sample_keys, num_patches=64):
    """Mirrors NCE_MLP.forward: returns (list of (B*P, 256) features, [])."""
    return_features = []
    return_ids = []  # torch module never appends to return_ids; keep it empty
    for feature, (w1, b1, w2, b2), k in zip(features, params, sample_keys):
        sample, _ = _sample_patches(feature, k, num_patches)
        out = mlp_head(sample, w1, b1, w2, b2)
        return_features.append(out)
    return return_features, return_ids


def _make_params(key, in_dims, nc=NC, gain=0.02):
    # TODO(synk): exact init_weights() scheme of the repo is not reproducible
    # here; weights are deterministic normal(0, gain), biases zero.
    params = []
    for c in in_dims:
        key, k1, k2 = jax.random.split(key, 3)
        w1 = gain * jax.random.normal(k1, (c, nc), dtype=jnp.float32)
        b1 = jnp.zeros((1, nc), jnp.float32)
        w2 = gain * jax.random.normal(k2, (nc, nc), dtype=jnp.float32)
        b2 = jnp.zeros((1, nc), jnp.float32)
        params.append((w1, b1, w2, b2))
    return params


def _reference_mlp(x, w1, b1, w2, b2):
    h = jnp.maximum(x @ w1 + b1, 0.0)
    return h @ w2 + b2


if __name__ == "__main__":
    root = jax.random.PRNGKey(0)
    k_feat, k_param, k_perm = jax.random.split(root, 3)

    B = 2
    num_patches = 64
    feat_shapes = [(B, 4, 16, 16), (B, 8, 8, 8)]

    feat_keys = jax.random.split(k_feat, len(feat_shapes))
    features = [jax.random.normal(k, s, dtype=jnp.float32)
                for k, s in zip(feat_keys, feat_shapes)]

    params = _make_params(k_param, [s[1] for s in feat_shapes])
    sample_keys = list(jax.random.split(k_perm, len(feat_shapes)))

    outs, ids = nce_mlp_forward(features, params, sample_keys,
                                num_patches=num_patches)
    outs = jax.block_until_ready(outs)

    # Verify against a pure-JAX reference using identical patch sampling.
    for feature, (w1, b1, w2, b2), k, out in zip(features, params,
                                                 sample_keys, outs):
        sample, _ = _sample_patches(feature, k, num_patches)
        ref = _reference_mlp(sample, w1, b1, w2, b2)
        np.testing.assert_allclose(np.asarray(out), np.asarray(ref),
                                   rtol=1e-5, atol=1e-5)
        assert out.shape == (sample.shape[0], NC)

    print("KERNEL_OK")
</pallas_src>

<mosaic_0001>
module attributes {stable_mosaic.version = 11 : i64} {
  func.func @_mlp_kernel(%arg0: i32, %arg1: memref<128x4xf32, #tpu.memory_space<vmem>>, %arg2: memref<4x256xf32, #tpu.memory_space<vmem>>, %arg3: memref<1x256xf32, #tpu.memory_space<vmem>>, %arg4: memref<256x256xf32, #tpu.memory_space<vmem>>, %arg5: memref<1x256xf32, #tpu.memory_space<vmem>>, %arg6: memref<128x256xf32, #tpu.memory_space<vmem>>) attributes {dimension_semantics = [#tpu.dimension_semantics<parallel>], iteration_bounds = array<i64: 1>, scalar_prefetch = 0 : i64, scratch_operands = 0 : i64, tpu.core_type = #tpu.core_type<tc>, window_params = [{transform_indices = @transform_0, window_bounds = array<i64: 128, 4>}, {pipeline_mode = #tpu.pipeline_mode<synchronous>, transform_indices = @transform_1, window_bounds = array<i64: 4, 256>}, {pipeline_mode = #tpu.pipeline_mode<synchronous>, transform_indices = @transform_2, window_bounds = array<i64: 1, 256>}, {pipeline_mode = #tpu.pipeline_mode<synchronous>, transform_indices = @transform_3, window_bounds = array<i64: 256, 256>}, {pipeline_mode = #tpu.pipeline_mode<synchronous>, transform_indices = @transform_4, window_bounds = array<i64: 1, 256>}, {transform_indices = @transform_5, window_bounds = array<i64: 128, 256>}]} {
    %c0 = arith.constant 0 : index
    %c0_0 = arith.constant 0 : index
    %0 = vector.load %arg1[%c0, %c0_0] : memref<128x4xf32, #tpu.memory_space<vmem>>, vector<128x4xf32>
    %c0_1 = arith.constant 0 : index
    %c0_2 = arith.constant 0 : index
    %1 = vector.load %arg2[%c0_1, %c0_2] : memref<4x256xf32, #tpu.memory_space<vmem>>, vector<4x256xf32>
    %cst = arith.constant dense<0.000000e+00> : vector<128x256xf32>
    %2 = tpu.matmul %0, %1, %cst {dimension_numbers = #tpu.dot_dimension_numbers<[1], [0], [0], [1], [0, 0, 1, 1], [], []>} : vector<128x4xf32>, vector<4x256xf32>, vector<128x256xf32> -> vector<128x256xf32>
    %c0_3 = arith.constant 0 : index
    %c0_4 = arith.constant 0 : index
    %3 = vector.load %arg3[%c0_3, %c0_4] : memref<1x256xf32, #tpu.memory_space<vmem>>, vector<1x256xf32>
    %4 = vector.broadcast %3 : vector<1x256xf32> to vector<128x256xf32>
    %5 = arith.addf %2, %4 : vector<128x256xf32>
    %cst_5 = arith.constant 0.000000e+00 : f32
    %6 = vector.broadcast %cst_5 : f32 to vector<128x256xf32>
    %7 = arith.maximumf %5, %6 : vector<128x256xf32>
    %c0_6 = arith.constant 0 : index
    %c0_7 = arith.constant 0 : index
    %8 = vector.load %arg4[%c0_6, %c0_7] : memref<256x256xf32, #tpu.memory_space<vmem>>, vector<256x256xf32>
    %cst_8 = arith.constant dense<0.000000e+00> : vector<128x256xf32>
    %9 = tpu.matmul %7, %8, %cst_8 {dimension_numbers = #tpu.dot_dimension_numbers<[1], [0], [0], [1], [0, 0, 1, 1], [], []>} : vector<128x256xf32>, vector<256x256xf32>, vector<128x256xf32> -> vector<128x256xf32>
    %c0_9 = arith.constant 0 : index
    %c0_10 = arith.constant 0 : index
    %10 = vector.load %arg5[%c0_9, %c0_10] : memref<1x256xf32, #tpu.memory_space<vmem>>, vector<1x256xf32>
    %11 = vector.broadcast %10 : vector<1x256xf32> to vector<128x256xf32>
    %12 = arith.addf %9, %11 : vector<128x256xf32>
    %c0_11 = arith.constant 0 : index
    %c0_12 = arith.constant 0 : index
    %13 = vector.load %arg6[%c0_11, %c0_12] : memref<128x256xf32, #tpu.memory_space<vmem>>, vector<128x256xf32>
    tpu.vector_store %arg6[%c0_11, %c0_12], %12 {strides = array<i32>} : memref<128x256xf32, #tpu.memory_space<vmem>>, vector<128x256xf32>,
    return
  }
  func.func @transform_0(%arg0: i32) -> (i32, i32) {
    %c0_i32 = arith.constant 0 : i32
    %c0_i32_0 = arith.constant 0 : i32
    return %arg0, %c0_i32 : i32, i32
  }
  func.func @transform_1(%arg0: i32) -> (i32, i32) {
    %c0_i32 = arith.constant 0 : i32
    %c0_i32_0 = arith.constant 0 : i32
    %c0_i32_1 = arith.constant 0 : i32
    return %c0_i32, %c0_i32_0 : i32, i32
  }
  func.func @transform_2(%arg0: i32) -> (i32, i32) {
    %c0_i32 = arith.constant 0 : i32
    %c0_i32_0 = arith.constant 0 : i32
    %c0_i32_1 = arith.constant 0 : i32
    return %c0_i32, %c0_i32_0 : i32, i32
  }
  func.func @transform_3(%arg0: i32) -> (i32, i32) {
    %c0_i32 = arith.constant 0 : i32
    %c0_i32_0 = arith.constant 0 : i32
    %c0_i32_1 = arith.constant 0 : i32
    return %c0_i32, %c0_i32_0 : i32, i32
  }
  func.func @transform_4(%arg0: i32) -> (i32, i32) {
    %c0_i32 = arith.constant 0 : i32
    %c0_i32_0 = arith.constant 0 : i32
    %c0_i32_1 = arith.constant 0 : i32
    return %c0_i32, %c0_i32_0 : i32, i32
  }
  func.func @transform_5(%arg0: i32) -> (i32, i32) {
    %c0_i32 = arith.constant 0 : i32
    %c0_i32_0 = arith.constant 0 : i32
    return %arg0, %c0_i32 : i32, i32
  }
}

</mosaic_0001>

<llo_original>
// kernel: tpu_custom_call.1
$region0: #{tpu_custom_call.1}
  #allocation0 [shape = 'u32[]', space=smem, size = 0x4, offset = 0x4, fixed_abs, tag = 'smem constant byte address 0x4 - core index']
  #allocation1 [shape = 'u32[144,128]{1,0:T(1,128)}', space=vmem, size = 0x12000, scoped, tag = 'internal scratch']
  %s0 = inlined_call_operand.vmem [shape: f32[128,4], index: 0, kind: input, shape index: {}]
  %s1 = inlined_call_operand.vmem [shape: f32[4,256], index: 1, kind: input, shape index: {}]
  %s2 = inlined_call_operand.vmem [shape: f32[1,256], index: 2, kind: input, shape index: {}]
  %s3 = inlined_call_operand.hbm [shape: f32[256,256], index: 3, kind: input, shape index: {}]
  %s4 = inlined_call_operand.vmem [shape: f32[1,256], index: 4, kind: input, shape index: {}]
  %s5 = inlined_call_operand.hbm [shape: f32[128,256], index: 5, kind: output, shape index: {}]
  %s6 = sld [smem:[#allocation0]]
  $region34: #{tpu_custom_call.1} parent=0
    _
  %s8 = ssub.s32 1, %s6
  %s9 = scalar_select 0, %s8, %s6
  $region1: #{tpu_custom_call.1} parent=0
    #allocation2 [shape = 'u8[262144]{0}', space=vmem, size = 0x40000, scoped, tag = 'input window, operand 3, single buffered']
    #allocation3 [shape = 's32[1]{0}', space=sflag, size = 0x4, scoped, tag = 'scoped memory for tpu_custom_call.1']
    #allocation4 [shape = 's32[1]{0}', space=sflag, size = 0x4, scoped, tag = 'scoped memory for tpu_custom_call.1']
    #allocation5 [shape = 'u8[131072]{0}', space=vmem, size = 0x20000, scoped, tag = 'output window, operand 0, single buffered']
    %10 = vsyncpa [#allocation3], 0
    %11 = vsyncpa [#allocation4], 0
    // Predicated region
    $region2: #{tpu_custom_call.1} parent=1 // pred_check
      _
    $region3: #{tpu_custom_call.1} parent=1 // pred_check_branch
      %13 = sbr.rel (0) target = $region5
    $region4: #{tpu_custom_call.1} parent=1 // pred_region
      _
    $region5: #{tpu_custom_call.1} parent=1 // pred_fallthru
      _
    // Predicated region
    $region6: #{tpu_custom_call.1} parent=1 // pred_check
      _
    $region7: #{tpu_custom_call.1} parent=1 // pred_check_branch
      %15 = sbr.rel (0) target = $region9
    $region8: #{tpu_custom_call.1} parent=1 // pred_region
      _
    $region9: #{tpu_custom_call.1} parent=1 // pred_fallthru
      _
    // Predicated region
    $region10: #{tpu_custom_call.1} parent=1 // pred_check
      _
    $region11: #{tpu_custom_call.1} parent=1 // pred_check_branch
      %17 = sbr.rel (0) target = $region13
    $region12: #{tpu_custom_call.1} parent=1 // pred_region
      _
    $region13: #{tpu_custom_call.1} parent=1 // pred_fallthru
      _
    // Predicated region
    $region14: #{tpu_custom_call.1} parent=1 // pred_check
      _
    $region15: #{tpu_custom_call.1} parent=1 // pred_check_branch
      %19 = sbr.rel (0) target = $region17
    $region16: #{tpu_custom_call.1} parent=1 // pred_region
      %s21 = ssub.s32 8192, 8192
      %22 = vsyncadd [#allocation3], %s21
      %s23 = sshll.u32 [#allocation2], 4
      %s24 = int_to_ptr.vmem [resolvable:$true] %s23
      %29 = dma.hbm_to_vmem [thread:$0]  %s3, 8192, %s24, [#allocation3], 256, 256, 16
    $region17: #{tpu_custom_call.1} parent=1 // pred_fallthru
      _
    // Predicated region
    $region18: #{tpu_custom_call.1} parent=1 // pred_check
      _
    $region19: #{tpu_custom_call.1} parent=1 // pred_check_branch
      %31 = sbr.rel (0) target = $region21
    $region20: #{tpu_custom_call.1} parent=1 // pred_region
      _
    $region21: #{tpu_custom_call.1} parent=1 // pred_fallthru
      _
    // Predicated region
    $region22: #{tpu_custom_call.1} parent=1 // pred_check
      _
    $region23: #{tpu_custom_call.1} parent=1 // pred_check_branch
      %33 = sbr.rel (0) target = $region25
    $region24: #{tpu_custom_call.1} parent=1 // pred_region
      %34 = dma.done [#allocation3], 8192
    $region25: #{tpu_custom_call.1} parent=1 // pred_fallthru
      _
    %v35 = vld [vmem:[%s0] sm:$0xff]
    %v36 = vld [vmem:[%s0 + $0x8] sm:$0xff]
    %v37 = vld [vmem:[%s0 + $0x10] sm:$0xff]
    %v38 = vld [vmem:[%s0 + $0x18] sm:$0xff]
    %v39 = vld [vmem:[%s0 + $0x20] sm:$0xff]
    %v40 = vld [vmem:[%s0 + $0x28] sm:$0xff]
    %v41 = vld [vmem:[%s0 + $0x30] sm:$0xff]
    %v42 = vld [vmem:[%s0 + $0x38] sm:$0xff]
    %v43 = vld [vmem:[%s0 + $0x40] sm:$0xff]
    %v44 = vld [vmem:[%s0 + $0x48] sm:$0xff]
    %v45 = vld [vmem:[%s0 + $0x50] sm:$0xff]
    %v46 = vld [vmem:[%s0 + $0x58] sm:$0xff]
    %v47 = vld [vmem:[%s0 + $0x60] sm:$0xff]
    %v48 = vld [vmem:[%s0 + $0x68] sm:$0xff]
    %v49 = vld [vmem:[%s0 + $0x70] sm:$0xff]
    %v50 = vld [vmem:[%s0 + $0x78] sm:$0xff]
    %v51 = vld [vmem:[%s1] sm:$0xff]
    %v52 = vld [vmem:[%s2] sm:$0x3]
    %v54 = vlaneseq
    %v55 = vshrl.u32 %v54, 7
    %v56 = vsub.s32 0, %v55
    %v57 = vrot.slane %v52, %v56
    %v58 = vlaneseq
    %v59 = vshrl.u32 %v58, 7
    %v60 = vsub.s32 1, %v59
    %v61 = vrot.slane %v52, %v60
    %v65 = vcombine.high %v51, %v51
    %vm66 = vcmask 31744
    %v68 = vsel %vm66, %v35, 0
    %v71 = vsel %vm66, %v36, 0
    %v74 = vsel %vm66, %v37, 0
    %v77 = vsel %vm66, %v38, 0
    %v80 = vsel %vm66, %v39, 0
    %v83 = vsel %vm66, %v40, 0
    %v86 = vsel %vm66, %v41, 0
    %v89 = vsel %vm66, %v42, 0
    %v92 = vsel %vm66, %v43, 0
    %v95 = vsel %vm66, %v44, 0
    %v98 = vsel %vm66, %v45, 0
    %v101 = vsel %vm66, %v46, 0
    %v104 = vsel %vm66, %v47, 0
    %v107 = vsel %vm66, %v48, 0
    %v110 = vsel %vm66, %v49, 0
    %v113 = vsel %vm66, %v50, 0
    %vm115 = vcmask 1043456
    %v116 = vsel %vm115, %v51, 0
    %v118 = vsel %vm115, %v65, 0
    %120 = vmatprep.subr.mxu0 0.0
    %121 = vmatpush1.msra.mxu0 0.0
    %122 = vmatprep.subr.mxu0 0.0
    %123 = vmatpush1.msra.mxu0 0.0
    %124 = vmatprep.subr.mxu0 0.0
    %125 = vmatpush1.msra.mxu0 0.0
    %126 = vmatprep.subr.mxu0 0.0
    %127 = vmatpush1.msra.mxu0 0.0
    %128 = vmatprep.subr.mxu0 0.0
    %129 = vmatpush1.msra.mxu0 0.0
    %130 = vmatprep.subr.mxu0 0.0
    %131 = vmatpush1.msra.mxu0 0.0
    %132 = vmatprep.subr.mxu0 0.0
    %133 = vmatpush1.msra.mxu0 0.0
    %134 = vmatprep.subr.mxu0 0.0
    %135 = vmatpush1.msra.mxu0 0.0
    %136 = vmatprep.subr.mxu0 0.0
    %137 = vmatpush1.msra.mxu0 0.0
    %138 = vmatprep.subr.mxu0 0.0
    %139 = vmatpush1.msra.mxu0 0.0
    %140 = vmatprep.subr.mxu0 0.0
    %141 = vmatpush1.msra.mxu0 0.0
    %142 = vmatprep.subr.mxu0 0.0
    %143 = vmatpush1.msra.mxu0 0.0
    %144 = vmatprep.subr.mxu0 0.0
    %145 = vmatpush1.msra.mxu0 0.0
    %146 = vmatprep.subr.mxu0 0.0
    %147 = vmatpush1.msra.mxu0 0.0
    %148 = vmatprep.subr.mxu0 0.0
    %149 = vmatpush1.msra.mxu0 0.0
    %150 = vmatprep.subr.mxu0 %v118
    %151 = vmatpush1.msra.mxu0 %v116
    %152 = vmatprep.subr.mxu0 0.0
    %153 = vmatpush2.msra.mxu0 0.0
    %154 = vmatprep.subr.mxu0 0.0
    %155 = vmatpush2.msra.mxu0 0.0
    %156 = vmatprep.subr.mxu0 0.0
    %157 = vmatpush2.msra.mxu0 0.0
    %158 = vmatprep.subr.mxu0 0.0
    %159 = vmatpush2.msra.mxu0 0.0
    %160 = vmatprep.subr.mxu0 0.0
    %161 = vmatpush2.msra.mxu0 0.0
    %162 = vmatprep.subr.mxu0 0.0
    %163 = vmatpush2.msra.mxu0 0.0
    %164 = vmatprep.subr.mxu0 0.0
    %165 = vmatpush2.msra.mxu0 0.0
    %166 = vmatprep.subr.mxu0 0.0
    %167 = vmatpush2.msra.mxu0 0.0
    %168 = vmatprep.subr.mxu0 0.0
    %169 = vmatpush2.msra.mxu0 0.0
    %170 = vmatprep.subr.mxu0 0.0
    %171 = vmatpush2.msra.mxu0 0.0
    %172 = vmatprep.subr.mxu0 0.0
    %173 = vmatpush2.msra.mxu0 0.0
    %174 = vmatprep.subr.mxu0 0.0
    %175 = vmatpush2.msra.mxu0 0.0
    %176 = vmatprep.subr.mxu0 0.0
    %177 = vmatpush2.msra.mxu0 0.0
    %178 = vmatprep.subr.mxu0 0.0
    %179 = vmatpush2.msra.mxu0 0.0
    %180 = vmatprep.subr.mxu0 0.0
    %181 = vmatpush2.msra.mxu0 0.0
    %182 = vmatprep.subr.mxu0 0.0
    %183 = vmatpush2.msra.mxu0 0.0
    %184 = vmatprep.mubr.f32.mxu0 0.0
    %185 = vmatmul.mubr.f32.gmra.mxu0 %v68
    %v186 = vpop.f32.mrf.mxu0
    %v187 = vadd.f32 %v57, %v186
    %v188 = vpop.f32.mrf.mxu0
    %v189 = vadd.f32 %v61, %v188
    %190 = vmatprep.mubr.f32.mxu0 0.0
    %191 = vmatmul.mubr.f32.gmra.mxu0 %v71
    %v192 = vpop.f32.mrf.mxu0
    %v193 = vadd.f32 %v57, %v192
    %v194 = vpop.f32.mrf.mxu0
    %v195 = vadd.f32 %v61, %v194
    %196 = vmatprep.mubr.f32.mxu0 0.0
    %197 = vmatmul.mubr.f32.gmra.mxu0 %v74
    %v198 = vpop.f32.mrf.mxu0
    %v199 = vadd.f32 %v57, %v198
    %v200 = vpop.f32.mrf.mxu0
    %v201 = vadd.f32 %v61, %v200
    %202 = vmatprep.mubr.f32.mxu0 0.0
    %203 = vmatmul.mubr.f32.gmra.mxu0 %v77
    %v204 = vpop.f32.mrf.mxu0
    %v205 = vadd.f32 %v57, %v204
    %v206 = vpop.f32.mrf.mxu0
    %v207 = vadd.f32 %v61, %v206
    %208 = vmatprep.mubr.f32.mxu0 0.0
    %209 = vmatmul.mubr.f32.gmra.mxu0 %v80
    %v210 = vpop.f32.mrf.mxu0
    %v211 = vadd.f32 %v57, %v210
    %v212 = vpop.f32.mrf.mxu0
    %v213 = vadd.f32 %v61, %v212
    %214 = vmatprep.mubr.f32.mxu0 0.0
    %215 = vmatmul.mubr.f32.gmra.mxu0 %v83
    %v216 = vpop.f32.mrf.mxu0
    %v217 = vadd.f32 %v57, %v216
    %v218 = vpop.f32.mrf.mxu0
    %v219 = vadd.f32 %v61, %v218
    %220 = vmatprep.mubr.f32.mxu0 0.0
    %221 = vmatmul.mubr.f32.gmra.mxu0 %v86
    %v222 = vpop.f32.mrf.mxu0
    %v223 = vadd.f32 %v57, %v222
    %v224 = vpop.f32.mrf.mxu0
    %v225 = vadd.f32 %v61, %v224
    %226 = vmatprep.mubr.f32.mxu0 0.0
    %227 = vmatmul.mubr.f32.gmra.mxu0 %v89
    %v228 = vpop.f32.mrf.mxu0
    %v229 = vadd.f32 %v57, %v228
    %v230 = vpop.f32.mrf.mxu0
    %v231 = vadd.f32 %v61, %v230
    %232 = vmatprep.mubr.f32.mxu0 0.0
    %233 = vmatmul.mubr.f32.gmra.mxu0 %v92
    %v234 = vpop.f32.mrf.mxu0
    %v235 = vadd.f32 %v57, %v234
    %v236 = vpop.f32.mrf.mxu0
    %v237 = vadd.f32 %v61, %v236
    %238 = vmatprep.mubr.f32.mxu0 0.0
    %239 = vmatmul.mubr.f32.gmra.mxu0 %v95
    %v240 = vpop.f32.mrf.mxu0
    %v241 = vadd.f32 %v57, %v240
    %v242 = vpop.f32.mrf.mxu0
    %v243 = vadd.f32 %v61, %v242
    %244 = vmatprep.mubr.f32.mxu0 0.0
    %245 = vmatmul.mubr.f32.gmra.mxu0 %v98
    %v246 = vpop.f32.mrf.mxu0
    %v247 = vadd.f32 %v57, %v246
    %v248 = vpop.f32.mrf.mxu0
    %v249 = vadd.f32 %v61, %v248
    %250 = vmatprep.mubr.f32.mxu0 0.0
    %251 = vmatmul.mubr.f32.gmra.mxu0 %v101
    %v252 = vpop.f32.mrf.mxu0
    %v253 = vadd.f32 %v57, %v252
    %v254 = vpop.f32.mrf.mxu0
    %v255 = vadd.f32 %v61, %v254
    %256 = vmatprep.mubr.f32.mxu0 0.0
    %257 = vmatmul.mubr.f32.gmra.mxu0 %v104
    %v258 = vpop.f32.mrf.mxu0
    %v259 = vadd.f32 %v57, %v258
    %v260 = vpop.f32.mrf.mxu0
    %v261 = vadd.f32 %v61, %v260
    %262 = vmatprep.mubr.f32.mxu0 0.0
    %263 = vmatmul.mubr.f32.gmra.mxu0 %v107
    %v264 = vpop.f32.mrf.mxu0
    %v265 = vadd.f32 %v57, %v264
    %v266 = vpop.f32.mrf.mxu0
    %v267 = vadd.f32 %v61, %v266
    %268 = vmatprep.mubr.f32.mxu0 0.0
    %269 = vmatmul.mubr.f32.gmra.mxu0 %v110
    %v270 = vpop.f32.mrf.mxu0
    %v271 = vadd.f32 %v57, %v270
    %v272 = vpop.f32.mrf.mxu0
    %v273 = vadd.f32 %v61, %v272
    %274 = vmatprep.mubr.f32.mxu0 0.0
    %275 = vmatmul.mubr.f32.gmra.mxu0 %v113
    %v276 = vpop.f32.mrf.mxu0
    %v277 = vadd.f32 %v57, %v276
    %v278 = vpop.f32.mrf.mxu0
    %v279 = vadd.f32 %v61, %v278
    %280 = vdwg.mxu0
    %v281 = vmax.f32 %v187, 0.0
    %v282 = vmax.f32 %v189, 0.0
    %v283 = vmax.f32 %v193, 0.0
    %v284 = vmax.f32 %v195, 0.0
    %v285 = vmax.f32 %v199, 0.0
    %v286 = vmax.f32 %v201, 0.0
    %v287 = vmax.f32 %v205, 0.0
    %v288 = vmax.f32 %v207, 0.0
    %v289 = vmax.f32 %v211, 0.0
    %v290 = vmax.f32 %v213, 0.0
    %v291 = vmax.f32 %v217, 0.0
    %v292 = vmax.f32 %v219, 0.0
    %v293 = vmax.f32 %v223, 0.0
    %v294 = vmax.f32 %v225, 0.0
    %v295 = vmax.f32 %v229, 0.0
    %v296 = vmax.f32 %v231, 0.0
    %v297 = vmax.f32 %v235, 0.0
    %v298 = vmax.f32 %v237, 0.0
    %v299 = vmax.f32 %v241, 0.0
    %v300 = vmax.f32 %v243, 0.0
    %v301 = vmax.f32 %v247, 0.0
    %v302 = vmax.f32 %v249, 0.0
    %v303 = vmax.f32 %v253, 0.0
    %v304 = vmax.f32 %v255, 0.0
    %v305 = vmax.f32 %v259, 0.0
    %v306 = vmax.f32 %v261, 0.0
    %v307 = vmax.f32 %v265, 0.0
    %v308 = vmax.f32 %v267, 0.0
    %v309 = vmax.f32 %v271, 0.0
    %v310 = vmax.f32 %v273, 0.0
    %v311 = vmax.f32 %v277, 0.0
    %v312 = vmax.f32 %v279, 0.0
    %v313 = vld [vmem:[#allocation2] sm:$0xff]
    %v314 = vld [vmem:[#allocation2 + $0x8] sm:$0xff]
    %v315 = vld [vmem:[#allocation2 + $0x10] sm:$0xff]
    %v316 = vld [vmem:[#allocation2 + $0x18] sm:$0xff]
    %v317 = vld [vmem:[#allocation2 + $0x20] sm:$0xff]
    %v318 = vld [vmem:[#allocation2 + $0x28] sm:$0xff]
    %v319 = vld [vmem:[#allocation2 + $0x30] sm:$0xff]
    %v320 = vld [vmem:[#allocation2 + $0x38] sm:$0xff]
    %v321 = vld [vmem:[#allocation2 + $0x40] sm:$0xff]
    %v322 = vld [vmem:[#allocation2 + $0x48] sm:$0xff]
    %v323 = vld [vmem:[#allocation2 + $0x50] sm:$0xff]
    %v324 = vld [vmem:[#allocation2 + $0x58] sm:$0xff]
    %v325 = vld [vmem:[#allocation2 + $0x60] sm:$0xff]
    %v326 = vld [vmem:[#allocation2 + $0x68] sm:$0xff]
    %v327 = vld [vmem:[#allocation2 + $0x70] sm:$0xff]
    %v328 = vld [vmem:[#allocation2 + $0x78] sm:$0xff]
    %v329 = vld [vmem:[#allocation2 + $0x80] sm:$0xff]
    %v330 = vld [vmem:[#allocation2 + $0x88] sm:$0xff]
    %v331 = vld [vmem:[#allocation2 + $0x90] sm:$0xff]
    %v332 = vld [vmem:[#allocation2 + $0x98] sm:$0xff]
    %v333 = vld [vmem:[#allocation2 + $0xa0] sm:$0xff]
    %v334 = vld [vmem:[#allocation2 + $0xa8] sm:$0xff]
    %v335 = vld [vmem:[#allocation2 + $0xb0] sm:$0xff]
    %v336 = vld [vmem:[#allocation2 + $0xb8] sm:$0xff]
    %v337 = vld [vmem:[#allocation2 + $0xc0] sm:$0xff]
    %v338 = vld [vmem:[#allocation2 + $0xc8] sm:$0xff]
    %v339 = vld [vmem:[#allocation2 + $0xd0] sm:$0xff]
    %v340 = vld [vmem:[#allocation2 + $0xd8] sm:$0xff]
    %v341 = vld [vmem:[#allocation2 + $0xe0] sm:$0xff]
    %v342 = vld [vmem:[#allocation2 + $0xe8] sm:$0xff]
    %v343 = vld [vmem:[#allocation2 + $0xf0] sm:$0xff]
    %v344 = vld [vmem:[#allocation2 + $0xf8] sm:$0xff]
    %v345 = vld [vmem:[#allocation2 + $0x100] sm:$0xff]
    %v346 = vld [vmem:[#allocation2 + $0x108] sm:$0xff]
    %v347 = vld [vmem:[#allocation2 + $0x110] sm:$0xff]
    %v348 = vld [vmem:[#allocation2 + $0x118] sm:$0xff]
    %v349 = vld [vmem:[#allocation2 + $0x120] sm:$0xff]
    %v350 = vld [vmem:[#allocation2 + $0x128] sm:$0xff]
    %v351 = vld [vmem:[#allocation2 + $0x130] sm:$0xff]
    %v352 = vld [vmem:[#allocation2 + $0x138] sm:$0xff]
    %v353 = vld [vmem:[#allocation2 + $0x140] sm:$0xff]
    %v354 = vld [vmem:[#allocation2 + $0x148] sm:$0xff]
    %v355 = vld [vmem:[#allocation2 + $0x150] sm:$0xff]
    %v356 = vld [vmem:[#allocation2 + $0x158] sm:$0xff]
    %v357 = vld [vmem:[#allocation2 + $0x160] sm:$0xff]
    %v358 = vld [vmem:[#allocation2 + $0x168] sm:$0xff]
    %v359 = vld [vmem:[#allocation2 + $0x170] sm:$0xff]
    %v360 = vld [vmem:[#allocation2 + $0x178] sm:$0xff]
    %v361 = vld [vmem:[#allocation2 + $0x180] sm:$0xff]
    %v362 = vld [vmem:[#allocation2 + $0x188] sm:$0xff]
    %v363 = vld [vmem:[#allocation2 + $0x190] sm:$0xff]
    %v364 = vld [vmem:[#allocation2 + $0x198] sm:$0xff]
    %v365 = vld [vmem:[#allocation2 + $0x1a0] sm:$0xff]
    %v366 = vld [vmem:[#allocation2 + $0x1a8] sm:$0xff]
    %v367 = vld [vmem:[#allocation2 + $0x1b0] sm:$0xff]
    %v368 = vld [vmem:[#allocation2 + $0x1b8] sm:$0xff]
    %v369 = vld [vmem:[#allocation2 + $0x1c0] sm:$0xff]
    %v370 = vld [vmem:[#allocation2 + $0x1c8] sm:$0xff]
    %v371 = vld [vmem:[#allocation2 + $0x1d0] sm:$0xff]
    %v372 = vld [vmem:[#allocation2 + $0x1d8] sm:$0xff]
    %v373 = vld [vmem:[#allocation2 + $0x1e0] sm:$0xff]
    %v374 = vld [vmem:[#allocation2 + $0x1e8] sm:$0xff]
    %v375 = vld [vmem:[#allocation2 + $0x1f0] sm:$0xff]
    %v376 = vld [vmem:[#allocation2 + $0x1f8] sm:$0xff]
    %v377 = vld [vmem:[%s4] sm:$0x3]
    %v379 = vlaneseq
    %v380 = vshrl.u32 %v379, 7
    %v381 = vsub.s32 0, %v380
    %v382 = vrot.slane %v377, %v381
    %v383 = vlaneseq
    %v384 = vshrl.u32 %v383, 7
    %v385 = vsub.s32 1, %v384
    %v386 = vrot.slane %v377, %v385
    %389 = vmatprep.subr.mxu0 %v344
    %390 = vmatpush1.msra.mxu0 %v343
    %391 = vmatprep.subr.mxu0 %v342
    %392 = vmatpush1.msra.mxu0 %v341
    %393 = vmatprep.subr.mxu0 %v340
    %394 = vmatpush1.msra.mxu0 %v339
    %395 = vmatprep.subr.mxu0 %v338
    %396 = vmatpush1.msra.mxu0 %v337
    %397 = vmatprep.subr.mxu0 %v336
    %398 = vmatpush1.msra.mxu0 %v335
    %399 = vmatprep.subr.mxu0 %v334
    %400 = vmatpush1.msra.mxu0 %v333
    %401 = vmatprep.subr.mxu0 %v332
    %402 = vmatpush1.msra.mxu0 %v331
    %403 = vmatprep.subr.mxu0 %v330
    %404 = vmatpush1.msra.mxu0 %v329
    %405 = vmatprep.subr.mxu0 %v328
    %406 = vmatpush1.msra.mxu0 %v327
    %407 = vmatprep.subr.mxu0 %v326
    %408 = vmatpush1.msra.mxu0 %v325
    %409 = vmatprep.subr.mxu0 %v324
    %410 = vmatpush1.msra.mxu0 %v323
    %411 = vmatprep.subr.mxu0 %v322
    %412 = vmatpush1.msra.mxu0 %v321
    %413 = vmatprep.subr.mxu0 %v320
    %414 = vmatpush1.msra.mxu0 %v319
    %415 = vmatprep.subr.mxu0 %v318
    %416 = vmatpush1.msra.mxu0 %v317
    %417 = vmatprep.subr.mxu0 %v316
    %418 = vmatpush1.msra.mxu0 %v315
    %419 = vmatprep.subr.mxu0 %v314
    %420 = vmatpush1.msra.mxu0 %v313
    %421 = vmatprep.subr.mxu0 %v376
    %422 = vmatpush2.msra.mxu0 %v375
    %423 = vmatprep.subr.mxu0 %v374
    %424 = vmatpush2.msra.mxu0 %v373
    %425 = vmatprep.subr.mxu0 %v372
    %426 = vmatpush2.msra.mxu0 %v371
    %427 = vmatprep.subr.mxu0 %v370
    %428 = vmatpush2.msra.mxu0 %v369
    %429 = vmatprep.subr.mxu0 %v368
    %430 = vmatpush2.msra.mxu0 %v367
    %431 = vmatprep.subr.mxu0 %v366
    %432 = vmatpush2.msra.mxu0 %v365
    %433 = vmatprep.subr.mxu0 %v364
    %434 = vmatpush2.msra.mxu0 %v363
    %435 = vmatprep.subr.mxu0 %v362
    %436 = vmatpush2.msra.mxu0 %v361
    %437 = vmatprep.subr.mxu0 %v360
    %438 = vmatpush2.msra.mxu0 %v359
    %439 = vmatprep.subr.mxu0 %v358
    %440 = vmatpush2.msra.mxu0 %v357
    %441 = vmatprep.subr.mxu0 %v356
    %442 = vmatpush2.msra.mxu0 %v355
    %443 = vmatprep.subr.mxu0 %v354
    %444 = vmatpush2.msra.mxu0 %v353
    %445 = vmatprep.subr.mxu0 %v352
    %446 = vmatpush2.msra.mxu0 %v351
    %447 = vmatprep.subr.mxu0 %v350
    %448 = vmatpush2.msra.mxu0 %v349
    %449 = vmatprep.subr.mxu0 %v348
    %450 = vmatpush2.msra.mxu0 %v347
    %451 = vmatprep.subr.mxu0 %v346
    %452 = vmatpush2.msra.mxu0 %v345
    %453 = vmatprep.mubr.f32.mxu0 %v282
    %454 = vmatmul.mubr.f32.gmra.mxu0 %v281
    %v455 = vpop.f32.mrf.mxu0
    %v456 = vadd.f32 %v382, %v455
    %v457 = vpop.f32.mrf.mxu0
    %v458 = vadd.f32 %v386, %v457
    %459 = vmatprep.mubr.f32.mxu0 %v284
    %460 = vmatmul.mubr.f32.gmra.mxu0 %v283
    %v461 = vpop.f32.mrf.mxu0
    %v462 = vadd.f32 %v382, %v461
    %v463 = vpop.f32.mrf.mxu0
    %v464 = vadd.f32 %v386, %v463
    %465 = vmatprep.mubr.f32.mxu0 %v286
    %466 = vmatmul.mubr.f32.gmra.mxu0 %v285
    %v467 = vpop.f32.mrf.mxu0
    %v468 = vadd.f32 %v382, %v467
    %v469 = vpop.f32.mrf.mxu0
    %v470 = vadd.f32 %v386, %v469
    %471 = vmatprep.mubr.f32.mxu0 %v288
    %472 = vmatmul.mubr.f32.gmra.mxu0 %v287
    %v473 = vpop.f32.mrf.mxu0
    %v474 = vadd.f32 %v382, %v473
    %v475 = vpop.f32.mrf.mxu0
    %v476 = vadd.f32 %v386, %v475
    %477 = vmatprep.mubr.f32.mxu0 %v290
    %478 = vmatmul.mubr.f32.gmra.mxu0 %v289
    %v479 = vpop.f32.mrf.mxu0
    %v480 = vadd.f32 %v382, %v479
    %v481 = vpop.f32.mrf.mxu0
    %v482 = vadd.f32 %v386, %v481
    %483 = vmatprep.mubr.f32.mxu0 %v292
    %484 = vmatmul.mubr.f32.gmra.mxu0 %v291
    %v485 = vpop.f32.mrf.mxu0
    %v486 = vadd.f32 %v382, %v485
    %v487 = vpop.f32.mrf.mxu0
    %v488 = vadd.f32 %v386, %v487
    %489 = vmatprep.mubr.f32.mxu0 %v294
    %490 = vmatmul.mubr.f32.gmra.mxu0 %v293
    %v491 = vpop.f32.mrf.mxu0
    %v492 = vadd.f32 %v382, %v491
    %v493 = vpop.f32.mrf.mxu0
    %v494 = vadd.f32 %v386, %v493
    %495 = vmatprep.mubr.f32.mxu0 %v296
    %496 = vmatmul.mubr.f32.gmra.mxu0 %v295
    %v497 = vpop.f32.mrf.mxu0
    %v498 = vadd.f32 %v382, %v497
    %v499 = vpop.f32.mrf.mxu0
    %v500 = vadd.f32 %v386, %v499
    %501 = vmatprep.mubr.f32.mxu0 %v298
    %502 = vmatmul.mubr.f32.gmra.mxu0 %v297
    %v503 = vpop.f32.mrf.mxu0
    %v504 = vadd.f32 %v382, %v503
    %v505 = vpop.f32.mrf.mxu0
    %v506 = vadd.f32 %v386, %v505
    %507 = vmatprep.mubr.f32.mxu0 %v300
    %508 = vmatmul.mubr.f32.gmra.mxu0 %v299
    %v509 = vpop.f32.mrf.mxu0
    %v510 = vadd.f32 %v382, %v509
    %v511 = vpop.f32.mrf.mxu0
    %v512 = vadd.f32 %v386, %v511
    %513 = vmatprep.mubr.f32.mxu0 %v302
    %514 = vmatmul.mubr.f32.gmra.mxu0 %v301
    %v515 = vpop.f32.mrf.mxu0
    %v516 = vadd.f32 %v382, %v515
    %v517 = vpop.f32.mrf.mxu0
    %v518 = vadd.f32 %v386, %v517
    %519 = vmatprep.mubr.f32.mxu0 %v304
    %520 = vmatmul.mubr.f32.gmra.mxu0 %v303
    %v521 = vpop.f32.mrf.mxu0
    %v522 = vadd.f32 %v382, %v521
    %v523 = vpop.f32.mrf.mxu0
    %v524 = vadd.f32 %v386, %v523
    %525 = vmatprep.mubr.f32.mxu0 %v306
    %526 = vmatmul.mubr.f32.gmra.mxu0 %v305
    %v527 = vpop.f32.mrf.mxu0
    %v528 = vadd.f32 %v382, %v527
    %v529 = vpop.f32.mrf.mxu0
    %v530 = vadd.f32 %v386, %v529
    %531 = vmatprep.mubr.f32.mxu0 %v308
    %532 = vmatmul.mubr.f32.gmra.mxu0 %v307
    %v533 = vpop.f32.mrf.mxu0
    %v534 = vadd.f32 %v382, %v533
    %v535 = vpop.f32.mrf.mxu0
    %v536 = vadd.f32 %v386, %v535
    %537 = vmatprep.mubr.f32.mxu0 %v310
    %538 = vmatmul.mubr.f32.gmra.mxu0 %v309
    %v539 = vpop.f32.mrf.mxu0
    %v540 = vadd.f32 %v382, %v539
    %v541 = vpop.f32.mrf.mxu0
    %v542 = vadd.f32 %v386, %v541
    %543 = vmatprep.mubr.f32.mxu0 %v312
    %544 = vmatmul.mubr.f32.gmra.mxu0 %v311
    %v545 = vpop.f32.mrf.mxu0
    %v546 = vadd.f32 %v382, %v545
    %v547 = vpop.f32.mrf.mxu0
    %v548 = vadd.f32 %v386, %v547
    %549 = vdwg.mxu0
    %550 = vst [vmem:[#allocation5] sm:$0xff] %v456
    %551 = vst [vmem:[#allocation5 + $0x8] sm:$0xff] %v458
    %552 = vst [vmem:[#allocation5 + $0x10] sm:$0xff] %v462
    %553 = vst [vmem:[#allocation5 + $0x18] sm:$0xff] %v464
    %554 = vst [vmem:[#allocation5 + $0x20] sm:$0xff] %v468
    %555 = vst [vmem:[#allocation5 + $0x28] sm:$0xff] %v470
    %556 = vst [vmem:[#allocation5 + $0x30] sm:$0xff] %v474
    %557 = vst [vmem:[#allocation5 + $0x38] sm:$0xff] %v476
    %558 = vst [vmem:[#allocation5 + $0x40] sm:$0xff] %v480
    %559 = vst [vmem:[#allocation5 + $0x48] sm:$0xff] %v482
    %560 = vst [vmem:[#allocation5 + $0x50] sm:$0xff] %v486
    %561 = vst [vmem:[#allocation5 + $0x58] sm:$0xff] %v488
    %562 = vst [vmem:[#allocation5 + $0x60] sm:$0xff] %v492
    %563 = vst [vmem:[#allocation5 + $0x68] sm:$0xff] %v494
    %564 = vst [vmem:[#allocation5 + $0x70] sm:$0xff] %v498
    %565 = vst [vmem:[#allocation5 + $0x78] sm:$0xff] %v500
    %566 = vst [vmem:[#allocation5 + $0x80] sm:$0xff] %v504
    %567 = vst [vmem:[#allocation5 + $0x88] sm:$0xff] %v506
    %568 = vst [vmem:[#allocation5 + $0x90] sm:$0xff] %v510
    %569 = vst [vmem:[#allocation5 + $0x98] sm:$0xff] %v512
    %570 = vst [vmem:[#allocation5 + $0xa0] sm:$0xff] %v516
    %571 = vst [vmem:[#allocation5 + $0xa8] sm:$0xff] %v518
    %572 = vst [vmem:[#allocation5 + $0xb0] sm:$0xff] %v522
    %573 = vst [vmem:[#allocation5 + $0xb8] sm:$0xff] %v524
    %574 = vst [vmem:[#allocation5 + $0xc0] sm:$0xff] %v528
    %575 = vst [vmem:[#allocation5 + $0xc8] sm:$0xff] %v530
    %576 = vst [vmem:[#allocation5 + $0xd0] sm:$0xff] %v534
    %577 = vst [vmem:[#allocation5 + $0xd8] sm:$0xff] %v536
    %578 = vst [vmem:[#allocation5 + $0xe0] sm:$0xff] %v540
    %579 = vst [vmem:[#allocation5 + $0xe8] sm:$0xff] %v542
    %580 = vst [vmem:[#allocation5 + $0xf0] sm:$0xff] %v546
    %581 = vst [vmem:[#allocation5 + $0xf8] sm:$0xff] %v548
    // Predicated region
    $region26: #{tpu_custom_call.1} parent=1 // pred_check
      _
    $region27: #{tpu_custom_call.1} parent=1 // pred_check_branch
      %583 = sbr.rel (0) target = $region29
    $region28: #{tpu_custom_call.1} parent=1 // pred_region
      %s585 = ssub.s32 4096, 4096
      %586 = vsyncadd [#allocation4], %s585
      %s587 = sshll.u32 [#allocation5], 4
      %s588 = int_to_ptr.vmem [resolvable:$true] %s587
      %593 = dma.vmem_to_hbm [thread:$0]  %s588, 4096, %s5, [#allocation4], 256, 256, 16
    $region29: #{tpu_custom_call.1} parent=1 // pred_fallthru
      _
    // Predicated region
    $region30: #{tpu_custom_call.1} parent=1 // pred_check
      _
    $region31: #{tpu_custom_call.1} parent=1 // pred_check_branch
      %595 = sbr.rel (0) target = $region33
    $region32: #{tpu_custom_call.1} parent=1 // pred_region
      %596 = dma.done [#allocation4], 4096
    $region33: #{tpu_custom_call.1} parent=1 // pred_fallthru
      _
    %597 = vsyncpa [#allocation3], 1
    %598 = vsyncpa [#allocation4], 1

</llo_original>
